<compile_context>
chip_gen: v5e
topology: v5e:2x2
jax: 0.10.0
libtpu: 0.0.40
codegen_flags: <defaults>
</compile_context>

<pallas_src>
import functools

import jax
import jax.numpy as jnp
from jax.experimental import pallas as pl
from jax.experimental.pallas import tpu as pltpu


def _round_up(x, m):
    return ((x + m - 1) // m) * m


def _critic_kernel(s_ref, a_ref, w1s_ref, w1a_ref, b1_ref, w2_ref, b2_ref,
                   w3_ref, b3_ref, out_ref):
    cdt = w1s_ref.dtype  # matmul compute dtype (bf16); accumulation is f32.

    # fc1 with the concat folded in: h1 = state @ w1_s + action @ w1_a + b1
    h1 = jnp.dot(s_ref[...].astype(cdt), w1s_ref[...],
                 preferred_element_type=jnp.float32)
    h1 = h1 + jnp.dot(a_ref[...].astype(cdt), w1a_ref[...],
                      preferred_element_type=jnp.float32)
    h1 = jnp.maximum(h1 + b1_ref[...], 0.0)          # bias + ReLU in f32 (VPU)

    # fc2 + ReLU
    h2 = jnp.dot(h1.astype(cdt), w2_ref[...],
                 preferred_element_type=jnp.float32)
    h2 = jnp.maximum(h2 + b2_ref[...], 0.0)

    # fc3: lane-dense (128 padded output columns; only column 0 is real).
    q = jnp.dot(h2.astype(cdt), w3_ref[...],
                preferred_element_type=jnp.float32)
    out_ref[...] = (q + b3_ref[...]).astype(out_ref.dtype)


@functools.partial(jax.jit, static_argnames=("tile_b",))
def critic_forward(state, action, params, *, tile_b=256):
    """Pallas implementation of Critic.forward(state, action) -> (batch, 1)."""
    w1s, w1a, b1, w2, b2, w3p, b3p = params
    batch, state_dim = state.shape
    action_dim = action.shape[1]
    h0 = w1s.shape[1]
    h1d = w2.shape[1]
    out_pad = w3p.shape[1]  # 128 (lane-dense padded output width)

    # Batch tiling: sublane-aligned tile, batch padded to a tile multiple.
    tb = min(tile_b, _round_up(batch, 8))
    padded = _round_up(batch, tb)
    if padded != batch:
        pad = padded - batch
        state = jnp.pad(state, ((0, pad), (0, 0)))
        action = jnp.pad(action, ((0, pad), (0, 0)))
    n_tiles = pl.cdiv(padded, tb)

    batch_spec = lambda feat: pl.BlockSpec((tb, feat), lambda i: (i, 0))
    const_spec = lambda r, c: pl.BlockSpec((r, c), lambda i: (0, 0))

    q_full = pl.pallas_call(
        _critic_kernel,
        out_shape=jax.ShapeDtypeStruct((padded, out_pad), jnp.float32),
        grid=(n_tiles,),
        in_specs=[
            batch_spec(state_dim),            # state tile
            batch_spec(action_dim),           # action tile
            const_spec(state_dim, h0),        # w1_s (VMEM-resident)
            const_spec(action_dim, h0),       # w1_a
            const_spec(1, h0),                # b1
            const_spec(h0, h1d),              # w2
            const_spec(1, h1d),               # b2
            const_spec(h1d, out_pad),         # w3 (padded to 128 cols)
            const_spec(1, out_pad),           # b3 (padded)
        ],
        out_specs=batch_spec(out_pad),
        compiler_params=pltpu.CompilerParams(
            dimension_semantics=("parallel",)),
    )(state, action, w1s, w1a, b1, w2, b2, w3p, b3p)

    return q_full[:batch, :1]


def init_critic_params(key, state_dim, action_dim, hidden_width0,
                       hidden_width1, compute_dtype=jnp.bfloat16,
                       out_pad=128):
    """Deterministic synthetic params.

    Weights stored as [in, out] in `compute_dtype` (bf16 for the MXU); biases
    in f32. fc1 weight is split into (state, action) parts; fc3 weight/bias
    are padded to `out_pad` lanes (column 0 is the real output).
    """
    in_dim = state_dim + action_dim
    k1, k2, k3, k4, k5, k6 = jax.random.split(key, 6)

    def lin(kw, kb, fan_in, fan_out):
        # Mimic PyTorch's default uniform(-1/sqrt(fan_in), 1/sqrt(fan_in)).
        bound = 1.0 / jnp.sqrt(jnp.float32(fan_in))
        w = jax.random.uniform(kw, (fan_in, fan_out), jnp.float32,
                               -bound, bound)
        b = jax.random.uniform(kb, (1, fan_out), jnp.float32, -bound, bound)
        return w, b

    w1, b1 = lin(k1, k2, in_dim, hidden_width0)
    w2, b2 = lin(k3, k4, hidden_width0, hidden_width1)
    w3, b3 = lin(k5, k6, hidden_width1, 1)

    # Split fc1 weight so the kernel fuses the state/action concat.
    w1s = w1[:state_dim].astype(compute_dtype)
    w1a = w1[state_dim:].astype(compute_dtype)

    # Pad fc3 to a lane-dense 128-wide output; only column 0 is real.
    w3p = jnp.zeros((hidden_width1, out_pad), jnp.float32).at[:, :1].set(w3)
    b3p = jnp.zeros((1, out_pad), jnp.float32).at[:, :1].set(b3)

    return (w1s, w1a, b1,
            w2.astype(compute_dtype), b2,
            w3p.astype(compute_dtype), b3p)


def critic_ref(state, action, params):
    """Pure-JAX reference with identical (bf16-matmul, f32-accum) semantics."""
    w1s, w1a, b1, w2, b2, w3p, b3p = params
    cdt = w1s.dtype
    h = (jnp.dot(state.astype(cdt), w1s, preferred_element_type=jnp.float32)
         + jnp.dot(action.astype(cdt), w1a,
                   preferred_element_type=jnp.float32))
    h = jnp.maximum(h + b1, 0.0)
    h = jnp.maximum(jnp.dot(h.astype(cdt), w2,
                            preferred_element_type=jnp.float32) + b2, 0.0)
    q = jnp.dot(h.astype(cdt), w3p, preferred_element_type=jnp.float32) + b3p
    return q[:, :1]


def critic_ref_f32(state, action, params):
    """Full-f32 reference of the original PyTorch module (looser check)."""
    w1s, w1a, b1, w2, b2, w3p, b3p = params
    w1 = jnp.concatenate([w1s, w1a], axis=0).astype(jnp.float32)
    x = jnp.concatenate([state, action], axis=1)
    h = jnp.maximum(x @ w1 + b1, 0.0)
    h = jnp.maximum(h @ w2.astype(jnp.float32) + b2, 0.0)
    return (h @ w3p.astype(jnp.float32) + b3p)[:, :1]


if __name__ == "__main__":
    # Small shapes consistent with the module's forward.
    batch = 8
    state_dim = 12
    action_dim = 4
    hidden_width0 = 32
    hidden_width1 = 32

    key = jax.random.PRNGKey(0)
    kp, ks, ka = jax.random.split(key, 3)

    params = init_critic_params(kp, state_dim, action_dim, hidden_width0,
                                hidden_width1)
    state = jax.random.normal(ks, (batch, state_dim), jnp.float32)
    action = jax.random.normal(ka, (batch, action_dim), jnp.float32)

    q = critic_forward(state, action, params)
    q = jax.block_until_ready(q)
    assert q.shape == (batch, 1)

    # Tight check vs. a reference with identical bf16-matmul semantics.
    q_ref = critic_ref(state, action, params)
    assert jnp.allclose(q, q_ref, atol=1e-3, rtol=1e-3)

    # Loose structural check vs. the original full-precision module semantics.
    q_f32 = critic_ref_f32(state, action, params)
    assert jnp.allclose(q, q_f32, atol=3e-2, rtol=3e-2)

    print("KERNEL_OK")
</pallas_src>

<mosaic_0001>
module attributes {stable_mosaic.version = 11 : i64} {
  func.func @_critic_kernel(%arg0: i32, %arg1: memref<8x12xf32, #tpu.memory_space<vmem>>, %arg2: memref<8x4xf32, #tpu.memory_space<vmem>>, %arg3: memref<12x32xbf16, #tpu.memory_space<vmem>>, %arg4: memref<4x32xbf16, #tpu.memory_space<vmem>>, %arg5: memref<1x32xf32, #tpu.memory_space<vmem>>, %arg6: memref<32x32xbf16, #tpu.memory_space<vmem>>, %arg7: memref<1x32xf32, #tpu.memory_space<vmem>>, %arg8: memref<32x128xbf16, #tpu.memory_space<vmem>>, %arg9: memref<1x128xf32, #tpu.memory_space<vmem>>, %arg10: memref<8x128xf32, #tpu.memory_space<vmem>>) attributes {dimension_semantics = [#tpu.dimension_semantics<parallel>], iteration_bounds = array<i64: 1>, scalar_prefetch = 0 : i64, scratch_operands = 0 : i64, tpu.core_type = #tpu.core_type<tc>, window_params = [{transform_indices = @transform_0, window_bounds = array<i64: 8, 12>}, {transform_indices = @transform_1, window_bounds = array<i64: 8, 4>}, {pipeline_mode = #tpu.pipeline_mode<synchronous>, transform_indices = @transform_2, window_bounds = array<i64: 12, 32>}, {pipeline_mode = #tpu.pipeline_mode<synchronous>, transform_indices = @transform_3, window_bounds = array<i64: 4, 32>}, {pipeline_mode = #tpu.pipeline_mode<synchronous>, transform_indices = @transform_4, window_bounds = array<i64: 1, 32>}, {pipeline_mode = #tpu.pipeline_mode<synchronous>, transform_indices = @transform_5, window_bounds = array<i64: 32, 32>}, {pipeline_mode = #tpu.pipeline_mode<synchronous>, transform_indices = @transform_6, window_bounds = array<i64: 1, 32>}, {pipeline_mode = #tpu.pipeline_mode<synchronous>, transform_indices = @transform_7, window_bounds = array<i64: 32, 128>}, {pipeline_mode = #tpu.pipeline_mode<synchronous>, transform_indices = @transform_8, window_bounds = array<i64: 1, 128>}, {transform_indices = @transform_9, window_bounds = array<i64: 8, 128>}]} {
    %c0 = arith.constant 0 : index
    %c0_0 = arith.constant 0 : index
    %0 = vector.load %arg1[%c0, %c0_0] : memref<8x12xf32, #tpu.memory_space<vmem>>, vector<8x12xf32>
    %1 = arith.truncf %0 : vector<8x12xf32> to vector<8x12xbf16>
    %c0_1 = arith.constant 0 : index
    %c0_2 = arith.constant 0 : index
    %2 = vector.load %arg3[%c0_1, %c0_2] : memref<12x32xbf16, #tpu.memory_space<vmem>>, vector<12x32xbf16>
    %cst = arith.constant dense<0.000000e+00> : vector<8x32xf32>
    %3 = tpu.matmul %1, %2, %cst {dimension_numbers = #tpu.dot_dimension_numbers<[1], [0], [0], [1], [0, 0, 1, 1], [], []>} : vector<8x12xbf16>, vector<12x32xbf16>, vector<8x32xf32> -> vector<8x32xf32>
    %c0_3 = arith.constant 0 : index
    %c0_4 = arith.constant 0 : index
    %4 = vector.load %arg2[%c0_3, %c0_4] : memref<8x4xf32, #tpu.memory_space<vmem>>, vector<8x4xf32>
    %5 = arith.truncf %4 : vector<8x4xf32> to vector<8x4xbf16>
    %c0_5 = arith.constant 0 : index
    %c0_6 = arith.constant 0 : index
    %6 = vector.load %arg4[%c0_5, %c0_6] : memref<4x32xbf16, #tpu.memory_space<vmem>>, vector<4x32xbf16>
    %cst_7 = arith.constant dense<0.000000e+00> : vector<8x32xf32>
    %7 = tpu.matmul %5, %6, %cst_7 {dimension_numbers = #tpu.dot_dimension_numbers<[1], [0], [0], [1], [0, 0, 1, 1], [], []>} : vector<8x4xbf16>, vector<4x32xbf16>, vector<8x32xf32> -> vector<8x32xf32>
    %8 = arith.addf %3, %7 : vector<8x32xf32>
    %c0_8 = arith.constant 0 : index
    %c0_9 = arith.constant 0 : index
    %9 = vector.load %arg5[%c0_8, %c0_9] : memref<1x32xf32, #tpu.memory_space<vmem>>, vector<1x32xf32>
    %10 = vector.broadcast %9 : vector<1x32xf32> to vector<8x32xf32>
    %11 = arith.addf %8, %10 : vector<8x32xf32>
    %cst_10 = arith.constant 0.000000e+00 : f32
    %12 = vector.broadcast %cst_10 : f32 to vector<8x32xf32>
    %13 = arith.maximumf %11, %12 : vector<8x32xf32>
    %14 = arith.truncf %13 : vector<8x32xf32> to vector<8x32xbf16>
    %c0_11 = arith.constant 0 : index
    %c0_12 = arith.constant 0 : index
    %15 = vector.load %arg6[%c0_11, %c0_12] : memref<32x32xbf16, #tpu.memory_space<vmem>>, vector<32x32xbf16>
    %cst_13 = arith.constant dense<0.000000e+00> : vector<8x32xf32>
    %16 = tpu.matmul %14, %15, %cst_13 {dimension_numbers = #tpu.dot_dimension_numbers<[1], [0], [0], [1], [0, 0, 1, 1], [], []>} : vector<8x32xbf16>, vector<32x32xbf16>, vector<8x32xf32> -> vector<8x32xf32>
    %c0_14 = arith.constant 0 : index
    %c0_15 = arith.constant 0 : index
    %17 = vector.load %arg7[%c0_14, %c0_15] : memref<1x32xf32, #tpu.memory_space<vmem>>, vector<1x32xf32>
    %18 = vector.broadcast %17 : vector<1x32xf32> to vector<8x32xf32>
    %19 = arith.addf %16, %18 : vector<8x32xf32>
    %cst_16 = arith.constant 0.000000e+00 : f32
    %20 = vector.broadcast %cst_16 : f32 to vector<8x32xf32>
    %21 = arith.maximumf %19, %20 : vector<8x32xf32>
    %22 = arith.truncf %21 : vector<8x32xf32> to vector<8x32xbf16>
    %c0_17 = arith.constant 0 : index
    %c0_18 = arith.constant 0 : index
    %23 = vector.load %arg8[%c0_17, %c0_18] : memref<32x128xbf16, #tpu.memory_space<vmem>>, vector<32x128xbf16>
    %cst_19 = arith.constant dense<0.000000e+00> : vector<8x128xf32>
    %24 = tpu.matmul %22, %23, %cst_19 {dimension_numbers = #tpu.dot_dimension_numbers<[1], [0], [0], [1], [0, 0, 1, 1], [], []>} : vector<8x32xbf16>, vector<32x128xbf16>, vector<8x128xf32> -> vector<8x128xf32>
    %c0_20 = arith.constant 0 : index
    %c0_21 = arith.constant 0 : index
    %25 = vector.load %arg9[%c0_20, %c0_21] : memref<1x128xf32, #tpu.memory_space<vmem>>, vector<1x128xf32>
    %26 = vector.broadcast %25 : vector<1x128xf32> to vector<8x128xf32>
    %27 = arith.addf %24, %26 : vector<8x128xf32>
    %c0_22 = arith.constant 0 : index
    %c0_23 = arith.constant 0 : index
    %28 = vector.load %arg10[%c0_22, %c0_23] : memref<8x128xf32, #tpu.memory_space<vmem>>, vector<8x128xf32>
    tpu.vector_store %arg10[%c0_22, %c0_23], %27 {strides = array<i32>} : memref<8x128xf32, #tpu.memory_space<vmem>>, vector<8x128xf32>,
    return
  }
  func.func @transform_0(%arg0: i32) -> (i32, i32) {
    %c0_i32 = arith.constant 0 : i32
    %c0_i32_0 = arith.constant 0 : i32
    return %arg0, %c0_i32 : i32, i32
  }
  func.func @transform_1(%arg0: i32) -> (i32, i32) {
    %c0_i32 = arith.constant 0 : i32
    %c0_i32_0 = arith.constant 0 : i32
    return %arg0, %c0_i32 : i32, i32
  }
  func.func @transform_2(%arg0: i32) -> (i32, i32) {
    %c0_i32 = arith.constant 0 : i32
    %c0_i32_0 = arith.constant 0 : i32
    %c0_i32_1 = arith.constant 0 : i32
    return %c0_i32, %c0_i32_0 : i32, i32
  }
  func.func @transform_3(%arg0: i32) -> (i32, i32) {
    %c0_i32 = arith.constant 0 : i32
    %c0_i32_0 = arith.constant 0 : i32
    %c0_i32_1 = arith.constant 0 : i32
    return %c0_i32, %c0_i32_0 : i32, i32
  }
  func.func @transform_4(%arg0: i32) -> (i32, i32) {
    %c0_i32 = arith.constant 0 : i32
    %c0_i32_0 = arith.constant 0 : i32
    %c0_i32_1 = arith.constant 0 : i32
    return %c0_i32, %c0_i32_0 : i32, i32
  }
  func.func @transform_5(%arg0: i32) -> (i32, i32) {
    %c0_i32 = arith.constant 0 : i32
    %c0_i32_0 = arith.constant 0 : i32
    %c0_i32_1 = arith.constant 0 : i32
    return %c0_i32, %c0_i32_0 : i32, i32
  }
  func.func @transform_6(%arg0: i32) -> (i32, i32) {
    %c0_i32 = arith.constant 0 : i32
    %c0_i32_0 = arith.constant 0 : i32
    %c0_i32_1 = arith.constant 0 : i32
    return %c0_i32, %c0_i32_0 : i32, i32
  }
  func.func @transform_7(%arg0: i32) -> (i32, i32) {
    %c0_i32 = arith.constant 0 : i32
    %c0_i32_0 = arith.constant 0 : i32
    %c0_i32_1 = arith.constant 0 : i32
    return %c0_i32, %c0_i32_0 : i32, i32
  }
  func.func @transform_8(%arg0: i32) -> (i32, i32) {
    %c0_i32 = arith.constant 0 : i32
    %c0_i32_0 = arith.constant 0 : i32
    %c0_i32_1 = arith.constant 0 : i32
    return %c0_i32, %c0_i32_0 : i32, i32
  }
  func.func @transform_9(%arg0: i32) -> (i32, i32) {
    %c0_i32 = arith.constant 0 : i32
    %c0_i32_0 = arith.constant 0 : i32
    return %arg0, %c0_i32 : i32, i32
  }
}

</mosaic_0001>

<llo_original>
// kernel: critic_forward.1
$region0: #{critic_forward.1}
  #allocation0 [shape = 'u32[]', space=smem, size = 0x4, offset = 0x4, fixed_abs, tag = 'smem constant byte address 0x4 - core index']
  #allocation1 [shape = 'u32[72,128]{1,0:T(1,128)}', space=vmem, size = 0x9000, scoped, tag = 'internal scratch']
  %s0 = inlined_call_operand.hbm [shape: f32[8,12], index: 0, kind: input, shape index: {}]
  %s1 = inlined_call_operand.vmem [shape: f32[8,4], index: 1, kind: input, shape index: {}]
  %s2 = inlined_call_operand.hbm [shape: bf16[12,32], index: 2, kind: input, shape index: {}]
  %s3 = inlined_call_operand.hbm [shape: bf16[4,32], index: 3, kind: input, shape index: {}]
  %s4 = inlined_call_operand.hbm [shape: f32[1,32], index: 4, kind: input, shape index: {}]
  %s5 = inlined_call_operand.vmem [shape: bf16[32,32], index: 5, kind: input, shape index: {}]
  %s6 = inlined_call_operand.vmem [shape: f32[1,32], index: 6, kind: input, shape index: {}]
  %s7 = inlined_call_operand.hbm [shape: bf16[32,128], index: 7, kind: input, shape index: {}]
  %s8 = inlined_call_operand.vmem [shape: f32[1,128], index: 8, kind: input, shape index: {}]
  %s9 = inlined_call_operand.vmem [shape: f32[8,128], index: 9, kind: output, shape index: {}]
  %s10 = sld [smem:[#allocation0]]
  $region66: #{critic_forward.1} parent=0
    _
  %s12 = ssub.s32 1, %s10
  %s13 = scalar_select 0, %s12, %s10
  $region1: #{critic_forward.1} parent=0
    #allocation2 [shape = 'u8[4096]{0}', space=vmem, size = 0x1000, scoped, tag = 'input window, operand 0, single buffered']
    #allocation3 [shape = 's32[1]{0}', space=sflag, size = 0x4, scoped, tag = 'scoped memory for critic_forward.1']
    #allocation4 [shape = 'u8[4096]{0}', space=vmem, size = 0x1000, scoped, tag = 'input window, operand 2, single buffered']
    #allocation5 [shape = 's32[1]{0}', space=sflag, size = 0x4, scoped, tag = 'scoped memory for critic_forward.1']
    #allocation6 [shape = 'u8[1024]{0}', space=vmem, size = 0x400, scoped, tag = 'input window, operand 3, single buffered']
    #allocation7 [shape = 'u8[512]{0}', space=vmem, size = 0x400, scoped, tag = 'input window, operand 4, single buffered']
    #allocation8 [shape = 's32[1]{0}', space=sflag, size = 0x4, scoped, tag = 'scoped memory for critic_forward.1']
    #allocation9 [shape = 'u8[8192]{0}', space=vmem, size = 0x2000, scoped, tag = 'input window, operand 7, single buffered']
    %14 = vsyncpa [#allocation3], 0
    %15 = vsyncpa [#allocation5], 0
    %16 = vsyncpa [#allocation8], 0
    // Predicated region
    $region2: #{critic_forward.1} parent=1 // pred_check
      _
    $region3: #{critic_forward.1} parent=1 // pred_check_branch
      %18 = sbr.rel (0) target = $region5
    $region4: #{critic_forward.1} parent=1 // pred_region
      %20 = vsyncadd [#allocation3], 0
      %s22 = sshll.u32 %s0, 4
      %s23 = int_to_ptr.hbm [resolvable:$true] %s22
      %s24 = sshll.u32 [#allocation2], 4
      %s25 = int_to_ptr.vmem [resolvable:$true] %s24
      %27 = dma.hbm_to_vmem [thread:$0]  %s23, 128, %s25, [#allocation3]
    $region5: #{critic_forward.1} parent=1 // pred_fallthru
      _
    // Predicated region
    $region6: #{critic_forward.1} parent=1 // pred_check
      _
    $region7: #{critic_forward.1} parent=1 // pred_check_branch
      %29 = sbr.rel (0) target = $region9
    $region8: #{critic_forward.1} parent=1 // pred_region
      _
    $region9: #{critic_forward.1} parent=1 // pred_fallthru
      _
    // Predicated region
    $region10: #{critic_forward.1} parent=1 // pred_check
      _
    $region11: #{critic_forward.1} parent=1 // pred_check_branch
      %31 = sbr.rel (0) target = $region13
    $region12: #{critic_forward.1} parent=1 // pred_region
      %33 = vsyncadd [#allocation5], 0
      %s34 = sshll.u32 %s2, 4
      %s35 = int_to_ptr.hbm [resolvable:$true] %s34
      %s36 = sshll.u32 [#allocation4], 4
      %s37 = int_to_ptr.vmem [resolvable:$true] %s36
      %42 = dma.hbm_to_vmem [thread:$0]  %s35, 128, %s37, [#allocation5], 64, 64, 4
    $region13: #{critic_forward.1} parent=1 // pred_fallthru
      _
    // Predicated region
    $region14: #{critic_forward.1} parent=1 // pred_check
      _
    $region15: #{critic_forward.1} parent=1 // pred_check_branch
      %44 = sbr.rel (0) target = $region17
    $region16: #{critic_forward.1} parent=1 // pred_region
      %46 = vsyncadd [#allocation5], 0
      %s48 = sshll.u32 %s3, 4
      %s49 = int_to_ptr.hbm [resolvable:$true] %s48
      %s50 = sshll.u32 [#allocation6], 4
      %s51 = int_to_ptr.vmem [resolvable:$true] %s50
      %53 = dma.hbm_to_vmem [thread:$0]  %s49, 32, %s51, [#allocation5]
    $region17: #{critic_forward.1} parent=1 // pred_fallthru
      _
    // Predicated region
    $region18: #{critic_forward.1} parent=1 // pred_check
      _
    $region19: #{critic_forward.1} parent=1 // pred_check_branch
      %55 = sbr.rel (0) target = $region21
    $region20: #{critic_forward.1} parent=1 // pred_region
      %57 = vsyncadd [#allocation8], 0
      %s59 = sshll.u32 %s4, 4
      %s60 = int_to_ptr.hbm [resolvable:$true] %s59
      %s61 = sshll.u32 [#allocation7], 4
      %s62 = int_to_ptr.vmem [resolvable:$true] %s61
      %64 = dma.hbm_to_vmem [thread:$0]  %s60, 16, %s62, [#allocation8]
    $region21: #{critic_forward.1} parent=1 // pred_fallthru
      _
    // Predicated region
    $region22: #{critic_forward.1} parent=1 // pred_check
      _
    $region23: #{critic_forward.1} parent=1 // pred_check_branch
      %66 = sbr.rel (0) target = $region25
    $region24: #{critic_forward.1} parent=1 // pred_region
      _
    $region25: #{critic_forward.1} parent=1 // pred_fallthru
      _
    // Predicated region
    $region26: #{critic_forward.1} parent=1 // pred_check
      _
    $region27: #{critic_forward.1} parent=1 // pred_check_branch
      %68 = sbr.rel (0) target = $region29
    $region28: #{critic_forward.1} parent=1 // pred_region
      _
    $region29: #{critic_forward.1} parent=1 // pred_fallthru
      _
    // Predicated region
    $region30: #{critic_forward.1} parent=1 // pred_check
      _
    $region31: #{critic_forward.1} parent=1 // pred_check_branch
      %70 = sbr.rel (0) target = $region33
    $region32: #{critic_forward.1} parent=1 // pred_region
      %72 = vsyncadd [#allocation8], 0
      %s73 = sshll.u32 %s7, 4
      %s74 = int_to_ptr.hbm [resolvable:$true] %s73
      %s75 = sshll.u32 [#allocation9], 4
      %s76 = int_to_ptr.vmem [resolvable:$true] %s75
      %81 = dma.hbm_to_vmem [thread:$0]  %s74, 256, %s76, [#allocation8], 64, 64, 4
    $region33: #{critic_forward.1} parent=1 // pred_fallthru
      _
    // Predicated region
    $region34: #{critic_forward.1} parent=1 // pred_check
      _
    $region35: #{critic_forward.1} parent=1 // pred_check_branch
      %83 = sbr.rel (0) target = $region37
    $region36: #{critic_forward.1} parent=1 // pred_region
      _
    $region37: #{critic_forward.1} parent=1 // pred_fallthru
      _
    // Predicated region
    $region38: #{critic_forward.1} parent=1 // pred_check
      _
    $region39: #{critic_forward.1} parent=1 // pred_check_branch
      %85 = sbr.rel (0) target = $region41
    $region40: #{critic_forward.1} parent=1 // pred_region
      %87 = dma.done [#allocation3], 128
    $region41: #{critic_forward.1} parent=1 // pred_fallthru
      _
    // Predicated region
    $region42: #{critic_forward.1} parent=1 // pred_check
      _
    $region43: #{critic_forward.1} parent=1 // pred_check_branch
      %89 = sbr.rel (0) target = $region45
    $region44: #{critic_forward.1} parent=1 // pred_region
      %91 = dma.done [#allocation5], 128
    $region45: #{critic_forward.1} parent=1 // pred_fallthru
      _
    // Predicated region
    $region46: #{critic_forward.1} parent=1 // pred_check
      _
    $region47: #{critic_forward.1} parent=1 // pred_check_branch
      %93 = sbr.rel (0) target = $region49
    $region48: #{critic_forward.1} parent=1 // pred_region
      %95 = dma.done [#allocation5], 32
    $region49: #{critic_forward.1} parent=1 // pred_fallthru
      _
    // Predicated region
    $region50: #{critic_forward.1} parent=1 // pred_check
      _
    $region51: #{critic_forward.1} parent=1 // pred_check_branch
      %97 = sbr.rel (0) target = $region53
    $region52: #{critic_forward.1} parent=1 // pred_region
      %99 = dma.done [#allocation8], 16
    $region53: #{critic_forward.1} parent=1 // pred_fallthru
      _
    // Predicated region
    $region54: #{critic_forward.1} parent=1 // pred_check
      _
    $region55: #{critic_forward.1} parent=1 // pred_check_branch
      %101 = sbr.rel (0) target = $region57
    $region56: #{critic_forward.1} parent=1 // pred_region
      %103 = dma.done [#allocation8], 256
    $region57: #{critic_forward.1} parent=1 // pred_fallthru
      _
    %v105 = vld [vmem:[#allocation2] sm:$0xff]
    %v106 = vpack.c.bf16 %v105, %v105
    %v107 = vld [vmem:[#allocation4] sm:$0xf]
    %v108 = vld [vmem:[#allocation4 + $0x4] sm:$0x3]
    %v109 = vld [vmem:[%s1] sm:$0xff]
    %v110 = vpack.c.bf16 %v109, %v109
    %v111 = vld [vmem:[#allocation6] sm:$0x3]
    %vm112 = vcmask 31744
    %v114 = vsel %vm112, %v110, 0
    %vm116 = vcmask 1041408
    %v118 = vsel %vm116, %v111, 0
    %120 = vmatpush.bf16.msra.mxu0 0
    %121 = vmatpush.bf16.msra.mxu0 0
    %122 = vmatpush.bf16.msra.mxu0 0
    %123 = vmatpush.bf16.msra.mxu0 0
    %124 = vmatpush.bf16.msra.mxu0 0
    %125 = vmatpush.bf16.msra.mxu0 0
    %126 = vmatpush.bf16.msra.mxu0 0
    %127 = vmatpush.bf16.msra.mxu0 %v118
    %128 = vmatmul.bf16.gmra.mxu0 %v114
    %v129 = vpop.f32.mrf.mxu0
    %v130 = vadd.f32 0.0, %v129
    %v131 = vpop.f32.mrf.mxu0
    %132 = vdwg.mxu0
    %v135 = vunpack.c.l.b16 %v107
    %v136 = vunpack.c.l.b16 %v108
    %v137 = vpack.c.b16 %v136, %v135
    %vm138 = vcmask 97280
    %v140 = vsel %vm138, %v106, 0
    %vm142 = vcmask 1045504
    %v144 = vsel %vm142, %v137, 0
    %146 = vmatpush.bf16.msra.mxu0 0
    %147 = vmatpush.bf16.msra.mxu0 0
    %148 = vmatpush.bf16.msra.mxu0 0
    %149 = vmatpush.bf16.msra.mxu0 0
    %150 = vmatpush.bf16.msra.mxu0 0
    %151 = vmatpush.bf16.msra.mxu0 0
    %152 = vmatpush.bf16.msra.mxu0 0
    %153 = vmatpush.bf16.msra.mxu0 %v144
    %154 = vmatmul.bf16.gmra.mxu0 %v140
    %v155 = vpop.f32.mrf.mxu0
    %v156 = vadd.f32 %v130, %v155
    %v157 = vpop.f32.mrf.mxu0
    %158 = vdwg.mxu0
    %v159 = vld [vmem:[#allocation7] sm:$0x1]
    %v161 = vperm.slane %v159, 0
    %v163 = vadd.f32 %v156, %v161
    %v164 = vmax.f32 %v163, 0.0
    %v165 = vpack.c.bf16 %v164, %v164
    %v166 = vld [vmem:[%s5] sm:$0xf]
    %v167 = vld [vmem:[%s5 + $0x4] sm:$0xf]
    %v168 = vld [vmem:[%s5 + $0x8] sm:$0xf]
    %v169 = vld [vmem:[%s5 + $0xc] sm:$0xf]
    %v170 = vld [vmem:[%s6] sm:$0x1]
    %v172 = vperm.slane %v170, 0
    %v178 = vunpack.c.l.b16 %v166
    %v179 = vunpack.c.l.b16 %v167
    %v180 = vunpack.c.l.b16 %v168
    %v181 = vunpack.c.l.b16 %v169
    %v182 = vpack.c.b16 %v179, %v178
    %v183 = vpack.c.b16 %v181, %v180
    %vm186 = vcmask 261120
    %v188 = vsel %vm186, %v165, 0
    %190 = vmatpush.bf16.msra.mxu0 0
    %191 = vmatpush.bf16.msra.mxu0 0
    %192 = vmatpush.bf16.msra.mxu0 0
    %193 = vmatpush.bf16.msra.mxu0 0
    %194 = vmatpush.bf16.msra.mxu0 0
    %195 = vmatpush.bf16.msra.mxu0 0
    %196 = vmatpush.bf16.msra.mxu0 %v183
    %197 = vmatpush.bf16.msra.mxu0 %v182
    %198 = vmatmul.bf16.gmra.mxu0 %v188
    %v199 = vpop.f32.mrf.mxu0
    %v200 = vadd.f32 %v172, %v199
    %v201 = vpop.f32.mrf.mxu0
    %202 = vdwg.mxu0
    %v203 = vmax.f32 %v200, 0.0
    %v204 = vpack.c.bf16 %v203, %v203
    %v205 = vld [vmem:[#allocation9] sm:$0xf]
    %v206 = vld [vmem:[#allocation9 + $0x4] sm:$0xf]
    %v207 = vld [vmem:[#allocation9 + $0x8] sm:$0xf]
    %v208 = vld [vmem:[#allocation9 + $0xc] sm:$0xf]
    %v209 = vld [vmem:[%s8] sm:$0x1]
    %v211 = vperm.slane %v209, 0
    %v217 = vunpack.c.l.b16 %v205
    %v218 = vunpack.c.l.b16 %v206
    %v219 = vunpack.c.l.b16 %v207
    %v220 = vunpack.c.l.b16 %v208
    %v221 = vpack.c.b16 %v218, %v217
    %v222 = vpack.c.b16 %v220, %v219
    %v226 = vsel %vm186, %v204, 0
    %228 = vmatpush.bf16.msra.mxu0 0
    %229 = vmatpush.bf16.msra.mxu0 0
    %230 = vmatpush.bf16.msra.mxu0 0
    %231 = vmatpush.bf16.msra.mxu0 0
    %232 = vmatpush.bf16.msra.mxu0 0
    %233 = vmatpush.bf16.msra.mxu0 0
    %234 = vmatpush.bf16.msra.mxu0 %v222
    %235 = vmatpush.bf16.msra.mxu0 %v221
    %236 = vmatmul.bf16.gmra.mxu0 %v226
    %v237 = vpop.f32.mrf.mxu0
    %v238 = vadd.f32 %v211, %v237
    %v239 = vpop.f32.mrf.mxu0
    %240 = vdwg.mxu0
    %241 = vst [vmem:[%s9] sm:$0xff] %v238
    // Predicated region
    $region58: #{critic_forward.1} parent=1 // pred_check
      _
    $region59: #{critic_forward.1} parent=1 // pred_check_branch
      %243 = sbr.rel (0) target = $region61
    $region60: #{critic_forward.1} parent=1 // pred_region
      _
    $region61: #{critic_forward.1} parent=1 // pred_fallthru
      _
    // Predicated region
    $region62: #{critic_forward.1} parent=1 // pred_check
      _
    $region63: #{critic_forward.1} parent=1 // pred_check_branch
      %245 = sbr.rel (0) target = $region65
    $region64: #{critic_forward.1} parent=1 // pred_region
      _
    $region65: #{critic_forward.1} parent=1 // pred_fallthru
      _
    %246 = vsyncpa [#allocation3], 1
    %247 = vsyncpa [#allocation5], 1
    %248 = vsyncpa [#allocation8], 1

</llo_original>
